<compile_context>
chip_gen: v7x
topology: tpu7x:2x2x1
jax: 0.10.0
libtpu: 0.0.40
codegen_flags: <defaults>
</compile_context>

<pallas_src>
import functools
import math

import jax
import jax.numpy as jnp
from jax.experimental import pallas as pl
from jax.experimental.pallas import tpu as pltpu


def _rgat_kernel(s1_ref, s2_ref, s3m_ref, h_ref, out_ref, *, alpha, concat):
    # Per-grid-step views (batch dim squeezed by the BlockSpecs):
    #   s1_ref:  (tile_i, 1)   query-side logit term   x_i . (W a1)
    #   s2_ref:  (1, N)        key-side logit term     x_j . (W a2)
    #   s3m_ref: (tile_i, N)   edge logit term edge_ij.(W1 a3) with the
    #                          adjacency mask already folded in as -inf
    #   h_ref:   (N, F_pad)    projected node features x @ W, bf16, zero-padded
    #   out_ref: (tile_i, F_pad)
    z = s1_ref[...] + s2_ref[...] + s3m_ref[...]            # (tile_i, N) logits
    e = jnp.where(z > 0, z, alpha * z)                      # LeakyReLU; -inf stays -inf

    # Row softmax over neighbours (lane axis).  A row with no neighbours
    # (all -inf) yields NaN, matching torch softmax of an all -inf row.
    m = jnp.max(e, axis=-1, keepdims=True)
    p = jnp.exp(e - m)
    denom = jnp.sum(p, axis=-1, keepdims=True)
    attention = p * (1.0 / denom)                           # exact normalization

    # TODO(synk): F.dropout on attention is identity in eval mode; training-mode
    # dropout is not implemented here.

    # bf16 MXU inputs, f32 accumulation (single MXU pass instead of f32 emulation).
    h_prime = jnp.dot(attention.astype(jnp.bfloat16), h_ref[...],
                      preferred_element_type=jnp.float32)   # (tile_i, F_pad)
    if concat:
        h_prime = jnp.where(h_prime > 0, h_prime, jnp.exp(h_prime) - 1.0)  # ELU
    out_ref[...] = h_prime.astype(out_ref.dtype)


def _round_up(v, m):
    return (v + m - 1) // m * m


def _vmem_limit_bytes():
    """Generation-aware VMEM limit (review: 48 MiB was too big for v7x, too small for v5e/v6e)."""
    try:
        cap = pltpu.get_tpu_info().vmem_capacity_bytes
    except Exception:
        cap = 64 * 1024 * 1024
    if cap >= 96 * 1024 * 1024:           # v5e / v6e: 128 MiB physical VMEM
        return 96 * 1024 * 1024
    return int(0.6 * cap)                 # v7x: 64 MiB physical -> ~38 MiB


def _pick_tile_i(n_k, f_pad, budget_bytes):
    """Largest query-node tile whose working set fits the VMEM budget."""
    if n_k <= 8:
        return n_k
    # Double-buffered s3m + out blocks, ~3 (tile_i, N) f32 temporaries, s1 rows.
    per_row = (2 * n_k + 2 * f_pad + 3 * n_k + 2) * 4
    # Per-batch residents (double-buffered on the batch grid axis): h (bf16) + s2.
    resident = 2 * (n_k * f_pad * 2 + n_k * 4)
    avail = max(budget_bytes - resident, 8 * per_row)
    t = min(n_k, avail // per_row)
    t = max(8, (int(t) // 8) * 8)
    # Non-divisor tiles are fine: grid uses cdiv; the tail block's OOB input rows
    # are padding and its OOB output rows are masked on store.
    return int(min(t, n_k))


def batch_rgat_forward(x, edge, adj, W, W1, a, *, alpha=0.2, adj_thre=0.0,
                       concat=True):
    b, n_k, in_f = x.shape
    out_f = W.shape[1]
    f_pad = _round_up(out_f, 128)                  # lane-dense output store
    hi_prec = jax.lax.Precision.HIGHEST

    # ---- one-time XLA-side prep (skinny projections + edge contraction) ----
    a1 = a[:out_f, 0]
    a2 = a[out_f:2 * out_f, 0]
    a3 = a[2 * out_f:, 0]
    wa1 = jnp.dot(W, a1, precision=hi_prec)        # (F_in,)
    wa2 = jnp.dot(W, a2, precision=hi_prec)        # (F_in,)
    w1a3 = jnp.dot(W1, a3, precision=hi_prec)      # (F_e,)

    s1 = jnp.einsum('bnf,f->bn', x, wa1, precision=hi_prec)[..., None]   # (B, N, 1)
    s2 = jnp.einsum('bnf,f->bn', x, wa2, precision=hi_prec)[:, None, :]  # (B, 1, N)
    s3 = jnp.einsum('bijf,f->bij', edge, w1a3, precision=hi_prec)        # (B, N, N)
    # Fold the adjacency mask into the streamed logit plane: adj never enters the kernel.
    s3m = jnp.where(adj > adj_thre, s3, -jnp.inf)                        # (B, N, N)

    h = jnp.einsum('bnf,fo->bno', x, W, precision=hi_prec)               # (B, N, F_out)
    h_pad = jnp.pad(h, ((0, 0), (0, 0), (0, f_pad - out_f))).astype(jnp.bfloat16)

    # ---- grid / tiling ----
    vmem_limit = _vmem_limit_bytes()
    tile_i = _pick_tile_i(n_k, f_pad, int(0.8 * vmem_limit))
    n_i = pl.cdiv(n_k, tile_i)
    if b == 1 and n_i == 1 and n_k >= 16:
        # Keep >=2 parallel grid steps so v7x's second TensorCore has work.
        tile_i = max(8, _round_up(pl.cdiv(n_k, 2), 8))
        n_i = pl.cdiv(n_k, tile_i)

    kernel = functools.partial(_rgat_kernel, alpha=alpha, concat=concat)

    out_padded = pl.pallas_call(
        kernel,
        out_shape=jax.ShapeDtypeStruct((b, n_k, f_pad), jnp.float32),
        grid_spec=pltpu.PrefetchScalarGridSpec(
            num_scalar_prefetch=0,
            grid=(b, n_i),
            in_specs=[
                pl.BlockSpec((None, tile_i, 1), lambda bi, ii: (bi, ii, 0)),   # s1
                pl.BlockSpec((None, 1, n_k), lambda bi, ii: (bi, 0, 0)),       # s2 (row)
                pl.BlockSpec((None, tile_i, n_k), lambda bi, ii: (bi, ii, 0)), # s3 + mask
                pl.BlockSpec((None, n_k, f_pad), lambda bi, ii: (bi, 0, 0)),   # h (bf16)
            ],
            out_specs=pl.BlockSpec((None, tile_i, f_pad),
                                   lambda bi, ii: (bi, ii, 0)),
        ),
        compiler_params=pltpu.CompilerParams(
            dimension_semantics=("parallel", "parallel"),
            vmem_limit_bytes=int(vmem_limit),
        ),
    )(s1, s2, s3m, h_pad)

    if f_pad != out_f:
        return out_padded[:, :, :out_f]
    return out_padded


def _xavier_uniform(key, shape, gain):
    fan_in, fan_out = shape[0], shape[1]
    bound = gain * math.sqrt(6.0 / (fan_in + fan_out))
    return jax.random.uniform(key, shape, jnp.float32, -bound, bound)


def _reference(x, edge, adj, W, W1, a, alpha, adj_thre, concat):
    hi_prec = jax.lax.Precision.HIGHEST
    b, n, _ = x.shape
    out_f = W.shape[1]
    h = jnp.einsum('bnf,fo->bno', x, W, precision=hi_prec)
    e_h = jnp.einsum('bijf,fo->bijo', edge, W1, precision=hi_prec)
    hi = jnp.broadcast_to(h[:, :, None, :], (b, n, n, out_f))
    hj = jnp.broadcast_to(h[:, None, :, :], (b, n, n, out_f))
    a_input = jnp.concatenate([hi, hj, e_h], axis=-1)
    e = jnp.squeeze(jnp.einsum('bijc,cd->bijd', a_input, a, precision=hi_prec), -1)
    e = jnp.where(e > 0, e, alpha * e)
    att = jnp.where(adj > adj_thre, e, -jnp.inf)
    att = jax.nn.softmax(att, axis=2)
    hp = jnp.einsum('bij,bjo->bio', att, h, precision=hi_prec)
    return jnp.where(hp > 0, hp, jnp.exp(hp) - 1.0) if concat else hp


if __name__ == "__main__":
    # Module hyper-parameters.
    in_features = 16
    e_in_features = 8
    out_features = 32
    alpha = 0.2          # LeakyReLU slope
    adj_thre = 0.0
    concat = True

    # Small example shapes: batch=2, n_k=8 nodes.
    B, N = 2, 8

    key = jax.random.PRNGKey(0)
    kx, ke, ka, kw, kw1, kav = jax.random.split(key, 6)

    x = jax.random.normal(kx, (B, N, in_features), jnp.float32)
    edge = jax.random.normal(ke, (B, N, N, e_in_features), jnp.float32)
    adj = jax.random.uniform(ka, (B, N, N), jnp.float32)  # > 0, so no empty rows

    # Deterministic xavier_uniform(gain=1.414) parameter init (matches __init__ shapes).
    W = _xavier_uniform(kw, (in_features, out_features), 1.414)
    W1 = _xavier_uniform(kw1, (e_in_features, out_features), 1.414)
    a = _xavier_uniform(kav, (3 * out_features, 1), 1.414)

    out = batch_rgat_forward(x, edge, adj, W, W1, a,
                             alpha=alpha, adj_thre=adj_thre, concat=concat)
    out = jax.block_until_ready(out)

    ref = _reference(x, edge, adj, W, W1, a, alpha, adj_thre, concat)
    assert out.shape == (B, N, out_features)
    # Tolerance budget: the only intentional approximation left is the bf16 MXU
    # input cast on the attention @ h aggregation (<~1% of |h|); everything else
    # (logit prep, softmax, reference) runs at f32 / Precision.HIGHEST.
    assert jnp.allclose(out, ref, rtol=2e-2, atol=2e-2), "mismatch vs pure-JAX reference"

    print("KERNEL_OK")
</pallas_src>

<mosaic_0001>
module attributes {stable_mosaic.version = 11 : i64} {
  func.func @_rgat_kernel(%arg0: i32, %arg1: i32, %arg2: memref<1x8x1xf32, #tpu.memory_space<vmem>>, %arg3: memref<1x1x8xf32, #tpu.memory_space<vmem>>, %arg4: memref<1x8x8xf32, #tpu.memory_space<vmem>>, %arg5: memref<1x8x128xbf16, #tpu.memory_space<vmem>>, %arg6: memref<1x8x128xf32, #tpu.memory_space<vmem>>) attributes {dimension_semantics = [#tpu.dimension_semantics<parallel>, #tpu.dimension_semantics<parallel>], iteration_bounds = array<i64: 2, 1>, scalar_prefetch = 0 : i64, scratch_operands = 0 : i64, tpu.core_type = #tpu.core_type<tc>, window_params = [{transform_indices = @transform_0, window_bounds = array<i64: 1, 8, 1>}, {transform_indices = @transform_1, window_bounds = array<i64: 1, 1, 8>}, {transform_indices = @transform_2, window_bounds = array<i64: 1, 8, 8>}, {transform_indices = @transform_3, window_bounds = array<i64: 1, 8, 128>}, {transform_indices = @transform_4, window_bounds = array<i64: 1, 8, 128>}]} {
    %c0 = arith.constant 0 : index
    %c0_0 = arith.constant 0 : index
    %c0_1 = arith.constant 0 : index
    %0 = vector.load %arg2[%c0, %c0_0, %c0_1] : memref<1x8x1xf32, #tpu.memory_space<vmem>>, vector<1x8x1xf32>
    %1 = vector.shape_cast %0 : vector<1x8x1xf32> to vector<8x1xf32>
    %c0_2 = arith.constant 0 : index
    %c0_3 = arith.constant 0 : index
    %c0_4 = arith.constant 0 : index
    %2 = vector.load %arg3[%c0_2, %c0_3, %c0_4] : memref<1x1x8xf32, #tpu.memory_space<vmem>>, vector<1x1x8xf32>
    %3 = vector.shape_cast %2 : vector<1x1x8xf32> to vector<1x8xf32>
    %4 = vector.broadcast %1 : vector<8x1xf32> to vector<8x8xf32>
    %5 = vector.broadcast %3 : vector<1x8xf32> to vector<8x8xf32>
    %6 = arith.addf %4, %5 : vector<8x8xf32>
    %c0_5 = arith.constant 0 : index
    %c0_6 = arith.constant 0 : index
    %c0_7 = arith.constant 0 : index
    %7 = vector.load %arg4[%c0_5, %c0_6, %c0_7] : memref<1x8x8xf32, #tpu.memory_space<vmem>>, vector<1x8x8xf32>
    %8 = vector.shape_cast %7 : vector<1x8x8xf32> to vector<8x8xf32>
    %9 = arith.addf %6, %8 : vector<8x8xf32>
    %cst = arith.constant 0.000000e+00 : f32
    %10 = vector.broadcast %cst : f32 to vector<8x8xf32>
    %11 = arith.cmpf ogt, %9, %10 : vector<8x8xf32>
    %cst_8 = arith.constant 2.000000e-01 : f32
    %12 = vector.broadcast %cst_8 : f32 to vector<8x8xf32>
    %13 = arith.mulf %12, %9 : vector<8x8xf32>
    %14 = arith.select %11, %9, %13 : vector<8x8xi1>, vector<8x8xf32>
    %cst_9 = arith.constant dense<0xFF800000> : vector<8xf32>
    %15 = vector.multi_reduction <maximumf>, %14, %cst_9 [1] : vector<8x8xf32> to vector<8xf32>
    %16 = vector.shape_cast %15 : vector<8xf32> to vector<8x1xf32>
    %17 = vector.broadcast %16 : vector<8x1xf32> to vector<8x8xf32>
    %18 = arith.subf %14, %17 : vector<8x8xf32>
    %19 = math.exp %18 : vector<8x8xf32>
    %cst_10 = arith.constant dense<0.000000e+00> : vector<8xf32>
    %20 = vector.multi_reduction <add>, %19, %cst_10 [1] : vector<8x8xf32> to vector<8xf32>
    %21 = vector.shape_cast %20 : vector<8xf32> to vector<8x1xf32>
    %cst_11 = arith.constant 1.000000e+00 : f32
    %22 = vector.broadcast %cst_11 : f32 to vector<8x1xf32>
    %23 = arith.divf %22, %21 : vector<8x1xf32>
    %24 = vector.broadcast %23 : vector<8x1xf32> to vector<8x8xf32>
    %25 = arith.mulf %19, %24 : vector<8x8xf32>
    %26 = arith.truncf %25 : vector<8x8xf32> to vector<8x8xbf16>
    %c0_12 = arith.constant 0 : index
    %c0_13 = arith.constant 0 : index
    %c0_14 = arith.constant 0 : index
    %27 = vector.load %arg5[%c0_12, %c0_13, %c0_14] : memref<1x8x128xbf16, #tpu.memory_space<vmem>>, vector<1x8x128xbf16>
    %28 = vector.shape_cast %27 : vector<1x8x128xbf16> to vector<8x128xbf16>
    %cst_15 = arith.constant dense<0.000000e+00> : vector<8x128xf32>
    %29 = tpu.matmul %26, %28, %cst_15 {dimension_numbers = #tpu.dot_dimension_numbers<[1], [0], [0], [1], [0, 0, 1, 1], [], []>} : vector<8x8xbf16>, vector<8x128xbf16>, vector<8x128xf32> -> vector<8x128xf32>
    %cst_16 = arith.constant 0.000000e+00 : f32
    %30 = vector.broadcast %cst_16 : f32 to vector<8x128xf32>
    %31 = arith.cmpf ogt, %29, %30 : vector<8x128xf32>
    %32 = math.exp %29 : vector<8x128xf32>
    %cst_17 = arith.constant 1.000000e+00 : f32
    %33 = vector.broadcast %cst_17 : f32 to vector<8x128xf32>
    %34 = arith.subf %32, %33 : vector<8x128xf32>
    %35 = arith.select %31, %29, %34 : vector<8x128xi1>, vector<8x128xf32>
    %c0_18 = arith.constant 0 : index
    %c0_19 = arith.constant 0 : index
    %c0_20 = arith.constant 0 : index
    %36 = vector.load %arg6[%c0_18, %c0_19, %c0_20] : memref<1x8x128xf32, #tpu.memory_space<vmem>>, vector<1x8x128xf32>
    %37 = vector.shape_cast %36 : vector<1x8x128xf32> to vector<8x128xf32>
    %38 = vector.shape_cast %35 : vector<8x128xf32> to vector<1x8x128xf32>
    tpu.vector_store %arg6[%c0_18, %c0_19, %c0_20], %38 {strides = array<i32>} : memref<1x8x128xf32, #tpu.memory_space<vmem>>, vector<1x8x128xf32>,
    return
  }
  func.func @transform_0(%arg0: i32, %arg1: i32) -> (i32, i32, i32) {
    %c0_i32 = arith.constant 0 : i32
    %c0_i32_0 = arith.constant 0 : i32
    return %arg0, %arg1, %c0_i32 : i32, i32, i32
  }
  func.func @transform_1(%arg0: i32, %arg1: i32) -> (i32, i32, i32) {
    %c0_i32 = arith.constant 0 : i32
    %c0_i32_0 = arith.constant 0 : i32
    %c0_i32_1 = arith.constant 0 : i32
    return %arg0, %c0_i32, %c0_i32_0 : i32, i32, i32
  }
  func.func @transform_2(%arg0: i32, %arg1: i32) -> (i32, i32, i32) {
    %c0_i32 = arith.constant 0 : i32
    %c0_i32_0 = arith.constant 0 : i32
    return %arg0, %arg1, %c0_i32 : i32, i32, i32
  }
  func.func @transform_3(%arg0: i32, %arg1: i32) -> (i32, i32, i32) {
    %c0_i32 = arith.constant 0 : i32
    %c0_i32_0 = arith.constant 0 : i32
    %c0_i32_1 = arith.constant 0 : i32
    return %arg0, %c0_i32, %c0_i32_0 : i32, i32, i32
  }
  func.func @transform_4(%arg0: i32, %arg1: i32) -> (i32, i32, i32) {
    %c0_i32 = arith.constant 0 : i32
    %c0_i32_0 = arith.constant 0 : i32
    return %arg0, %arg1, %c0_i32 : i32, i32, i32
  }
}

</mosaic_0001>

<llo_original>
// kernel: tpu_custom_call.1
$region0: #{tpu_custom_call.1}
  #allocation0 [shape = 'u32[]', space=smem, size = 0x4, offset = 0x4, fixed_abs, tag = 'smem constant byte address 0x4 - core index']
  #allocation1 [shape = 'u32[144,128]{1,0:T(1,128)}', space=vmem, size = 0x12000, scoped, tag = 'internal scratch']
  %s0 = inlined_call_operand.vmem [shape: f32[2,8,1], index: 0, kind: input, shape index: {}]
  %s1 = inlined_call_operand.hbm [shape: f32[2,1,8], index: 1, kind: input, shape index: {}]
  %s2 = inlined_call_operand.vmem [shape: f32[2,8,8], index: 2, kind: input, shape index: {}]
  %s3 = inlined_call_operand.vmem [shape: bf16[2,8,128], index: 3, kind: input, shape index: {}]
  %s4 = inlined_call_operand.hbm [shape: f32[2,8,128], index: 4, kind: output, shape index: {}]
  %s5 = sld [smem:[#allocation0]]
  $region53: #{tpu_custom_call.1} parent=0
    _
  %s7 = ssub.s32 1, %s5
  %s8 = scalar_select 0, %s7, %s5
  $region1: #{tpu_custom_call.1} parent=0
    #allocation2 [shape = 'u8[1024]{0}', space=vmem, size = 0x400, scoped, tag = 'input window, operand 1']
    #allocation3 [shape = 's32[2]{0}', space=sflag, size = 0x8, scoped, tag = 'scoped memory for tpu_custom_call.1']
    #allocation4 [shape = 's32[2]{0}', space=sflag, size = 0x8, scoped, tag = 'scoped memory for tpu_custom_call.1']
    #allocation5 [shape = 'u8[8192]{0}', space=vmem, size = 0x2000, scoped, tag = 'output window, operand 0']
    %9 = vsyncpa [#allocation3], 0
    %s10 = scalar_lea.sflag [#allocation3], 1
    %11 = vsyncpa %s10, 0
    %12 = vsyncpa [#allocation4], 0
    %s13 = scalar_lea.sflag [#allocation4], 1
    %14 = vsyncpa %s13, 0
    loop: start=0, step=1, limit=4
    $region2: #{tpu_custom_call.1} parent=1 // loop_pre_header
      _
    $region3: #{tpu_custom_call.1} parent=1 // loop_header
      %s16 = sphi 0, %s20
      %p17 = scmp.ge.s32.totalorder %s16, 4
      %s23 = sphi 0, %s35
      %s24 = sphi 0, %s31
      %s25 = sphi 0, %s23
      %s26 = sphi 0, %s24
      %s27 = sphi 0, %s25
      %s28 = sphi 0, %s26
      %s40 = sphi 0, %s42
      %s43 = sphi 0, %s40
      %s44 = sphi 0, %s43
      %s60 = sphi 0, %s44
      %s66 = sphi 0, %s68
      %s69 = sphi 0, %s66
      %s70 = sphi 0, %s69
      %s86 = sphi 0, %s70
      %s94 = sphi 0, %s96
      %s97 = sphi 0, %s94
      %s98 = sphi 0, %s97
      %s114 = sphi 0, %s98
      %s120 = sphi 0, %s122
      %s123 = sphi 0, %s120
      %s124 = sphi 0, %s123
      %s140 = sphi 0, %s124
      %s148 = sphi 0, %s150
      %s151 = sphi 0, %s148
      %s152 = sphi 0, %s151
      %s168 = sphi 0, %s152
    $region4: #{tpu_custom_call.1} parent=1 // loop_header_branch
      %19 = sbr.rel (%p17) target = $region8
    $region5: #{tpu_custom_call.1} parent=1 // loop_body
      %s21 = ssub.s32 %s16, 1
      %s22 = ssub.s32 %s16, 2
      %s29 = sadd.s32 1, %s24
      %p30 = scmp.ge.s32.totalorder %s29, 1
      %s31 = scalar_select %p30, 0, %s29
      %s32 = sadd.s32 1, %s23
      %s33 = scalar_select %p30, %s32, %s23
      %p34 = scmp.ge.s32.totalorder %s33, 2
      %s35 = scalar_select %p34, 0, %s33
      %s36 = ssub.s32 %s23, %s35
      %s37 = ssub.s32 %s24, %s31
      %s38 = sor.u32 %s36, %s37
      %p39 = scmp.eq.s32.totalorder %s38, 0
      %s41 = sadd.s32 %s40, 1
      %s42 = scalar_select %p39, %s40, %s41
      %p45 = pneg %p39
      %p46 = scmp.eq.s32.totalorder %s16, 1
      %p47 = por %p45, %p46
      %p48 = scmp.ne.s32.totalorder %s40, %s43
      %p49 = scmp.eq.s32.totalorder %s16, 0
      %p50 = por %p48, %p49
      %p51 = scmp.ne.s32.totalorder %s40, %s43
      %p52 = scmp.eq.s32.totalorder %s21, 1
      %p53 = por %p51, %p52
      %p54 = scmp.ne.s32.totalorder %s43, %s44
      %p55 = scmp.eq.s32.totalorder %s21, 0
      %p56 = por %p54, %p55
      %p57 = scmp.ne.s32.totalorder %s43, %s44
      %p58 = scmp.eq.s32.totalorder %s22, 1
      %p59 = por %p57, %p58
      %p61 = scmp.ne.s32.totalorder %s44, %s60
      %p62 = scmp.eq.s32.totalorder %s22, 0
      %p63 = por %p61, %p62
      %s64 = ssub.s32 %s23, %s35
      %p65 = scmp.eq.s32.totalorder %s64, 0
      %s67 = sadd.s32 %s66, 1
      %s68 = scalar_select %p65, %s66, %s67
      %p71 = pneg %p65
      %p72 = scmp.eq.s32.totalorder %s16, 1
      %p73 = por %p71, %p72
      %p74 = scmp.ne.s32.totalorder %s66, %s69
      %p75 = scmp.eq.s32.totalorder %s16, 0
      %p76 = por %p74, %p75
      %p77 = scmp.ne.s32.totalorder %s66, %s69
      %p78 = scmp.eq.s32.totalorder %s21, 1
      %p79 = por %p77, %p78
      %p80 = scmp.ne.s32.totalorder %s69, %s70
      %p81 = scmp.eq.s32.totalorder %s21, 0
      %p82 = por %p80, %p81
      %p83 = scmp.ne.s32.totalorder %s69, %s70
      %p84 = scmp.eq.s32.totalorder %s22, 1
      %p85 = por %p83, %p84
      %p87 = scmp.ne.s32.totalorder %s70, %s86
      %p88 = scmp.eq.s32.totalorder %s22, 0
      %p89 = por %p87, %p88
      %s90 = ssub.s32 %s23, %s35
      %s91 = ssub.s32 %s24, %s31
      %s92 = sor.u32 %s90, %s91
      %p93 = scmp.eq.s32.totalorder %s92, 0
      %s95 = sadd.s32 %s94, 1
      %s96 = scalar_select %p93, %s94, %s95
      %p99 = pneg %p93
      %p100 = scmp.eq.s32.totalorder %s16, 1
      %p101 = por %p99, %p100
      %p102 = scmp.ne.s32.totalorder %s94, %s97
      %p103 = scmp.eq.s32.totalorder %s16, 0
      %p104 = por %p102, %p103
      %p105 = scmp.ne.s32.totalorder %s94, %s97
      %p106 = scmp.eq.s32.totalorder %s21, 1
      %p107 = por %p105, %p106
      %p108 = scmp.ne.s32.totalorder %s97, %s98
      %p109 = scmp.eq.s32.totalorder %s21, 0
      %p110 = por %p108, %p109
      %p111 = scmp.ne.s32.totalorder %s97, %s98
      %p112 = scmp.eq.s32.totalorder %s22, 1
      %p113 = por %p111, %p112
      %p115 = scmp.ne.s32.totalorder %s98, %s114
      %p116 = scmp.eq.s32.totalorder %s22, 0
      %p117 = por %p115, %p116
      %s118 = ssub.s32 %s23, %s35
      %p119 = scmp.eq.s32.totalorder %s118, 0
      %s121 = sadd.s32 %s120, 1
      %s122 = scalar_select %p119, %s120, %s121
      %p125 = pneg %p119
      %p126 = scmp.eq.s32.totalorder %s16, 1
      %p127 = por %p125, %p126
      %p128 = scmp.ne.s32.totalorder %s120, %s123
      %p129 = scmp.eq.s32.totalorder %s16, 0
      %p130 = por %p128, %p129
      %p131 = scmp.ne.s32.totalorder %s120, %s123
      %p132 = scmp.eq.s32.totalorder %s21, 1
      %p133 = por %p131, %p132
      %p134 = scmp.ne.s32.totalorder %s123, %s124
      %p135 = scmp.eq.s32.totalorder %s21, 0
      %p136 = por %p134, %p135
      %p137 = scmp.ne.s32.totalorder %s123, %s124
      %p138 = scmp.eq.s32.totalorder %s22, 1
      %p139 = por %p137, %p138
      %p141 = scmp.ne.s32.totalorder %s124, %s140
      %p142 = scmp.eq.s32.totalorder %s22, 0
      %p143 = por %p141, %p142
      %s144 = ssub.s32 %s23, %s35
      %s145 = ssub.s32 %s24, %s31
      %s146 = sor.u32 %s144, %s145
      %p147 = scmp.eq.s32.totalorder %s146, 0
      %s149 = sadd.s32 %s148, 1
      %s150 = scalar_select %p147, %s148, %s149
      %p153 = pneg %p147
      %p154 = scmp.eq.s32.totalorder %s16, 1
      %p155 = por %p153, %p154
      %p156 = scmp.ne.s32.totalorder %s148, %s151
      %p157 = scmp.eq.s32.totalorder %s16, 0
      %p158 = por %p156, %p157
      %p159 = scmp.ne.s32.totalorder %s148, %s151
      %p160 = scmp.eq.s32.totalorder %s21, 1
      %p161 = por %p159, %p160
      %p162 = scmp.ne.s32.totalorder %s151, %s152
      %p163 = scmp.eq.s32.totalorder %s21, 0
      %p164 = por %p162, %p163
      %p165 = scmp.ne.s32.totalorder %s151, %s152
      %p166 = scmp.eq.s32.totalorder %s22, 1
      %p167 = por %p165, %p166
      %p169 = scmp.ne.s32.totalorder %s152, %s168
      %p170 = scmp.eq.s32.totalorder %s22, 0
      %p171 = por %p169, %p170
      %p172 = scmp.le.s32.totalorder 1, %s16
      %p173 = scmp.lt.s32.totalorder %s16, 3
      %p174 = pnand %p172, %p173
      %p175 = pneg %p174
      // Predicated region
      $region9: #{tpu_custom_call.1} parent=5 // pred_check
        _
      $region10: #{tpu_custom_call.1} parent=5 // pred_check_branch
        %177 = sbr.rel (%p174) target = $region12
      $region11: #{tpu_custom_call.1} parent=5 // pred_region
        %s178 = ssub.s32 %s16, 1
      $region12: #{tpu_custom_call.1} parent=5 // pred_fallthru
        _
      %p179 = scmp.lt.s32.totalorder %s16, 2
      // Predicated region
      $region13: #{tpu_custom_call.1} parent=5 // pred_check
        %p180 = pneg %p179
      $region14: #{tpu_custom_call.1} parent=5 // pred_check_branch
        %182 = sbr.rel (%p180) target = $region16
      $region15: #{tpu_custom_call.1} parent=5 // pred_region
        // Predicated region
        $region17: #{tpu_custom_call.1} parent=15 // pred_check
          %p183 = pneg %p50
        $region18: #{tpu_custom_call.1} parent=15 // pred_check_branch
          %185 = sbr.rel (%p183) target = $region20
        $region19: #{tpu_custom_call.1} parent=15 // pred_region
          %p186 = scmp.lt.s32.totalorder %s23, 1
          %s187 = scalar_select %p186, %s23, 1
          %p188 = scmp.lt.s32.totalorder %s24, 0
          %s189 = scalar_select %p188, %s24, 0
          %s190 = sadd.s32 %s189, %s187
          %s191 = smul.addr %s190, 8
          %s192 = scalar_lea.vmem %s0, %s191
        $region20: #{tpu_custom_call.1} parent=15 // pred_fallthru
          _
        // Predicated region
        $region21: #{tpu_custom_call.1} parent=15 // pred_check
          %p193 = pneg %p76
        $region22: #{tpu_custom_call.1} parent=15 // pred_check_branch
          %195 = sbr.rel (%p193) target = $region24
        $region23: #{tpu_custom_call.1} parent=15 // pred_region
          %s196 = sand.u32 %s66, 1
          %s197 = scalar_lea.sflag [#allocation3], %s196
          %s198 = sand.u32 %s66, 1
          %s199 = scalar_lea.vmem [#allocation2], %s198
          %s201 = ssub.s32 16, 16
          %202 = vsyncadd %s197, %s201
          %s203 = smul.addr %s23, 16
          %s204 = scalar_lea.hbm %s1, %s203
          %s206 = sshll.u32 %s199, 4
          %s207 = int_to_ptr.vmem [resolvable:$true] %s206
          %209 = dma.hbm_to_vmem [thread:$0]  %s204, 16, %s207, %s197
        $region24: #{tpu_custom_call.1} parent=15 // pred_fallthru
          _
        // Predicated region
        $region25: #{tpu_custom_call.1} parent=15 // pred_check
          %p210 = pneg %p104
        $region26: #{tpu_custom_call.1} parent=15 // pred_check_branch
          %212 = sbr.rel (%p210) target = $region28
        $region27: #{tpu_custom_call.1} parent=15 // pred_region
          %p213 = scmp.lt.s32.totalorder %s23, 1
          %s214 = scalar_select %p213, %s23, 1
          %p215 = scmp.lt.s32.totalorder %s24, 0
          %s216 = scalar_select %p215, %s24, 0
          %s217 = sadd.s32 %s216, %s214
          %s218 = smul.addr %s217, 8
          %s219 = scalar_lea.vmem %s2, %s218
        $region28: #{tpu_custom_call.1} parent=15 // pred_fallthru
          _
        // Predicated region
        $region29: #{tpu_custom_call.1} parent=15 // pred_check
          %p220 = pneg %p130
        $region30: #{tpu_custom_call.1} parent=15 // pred_check_branch
          %222 = sbr.rel (%p220) target = $region32
        $region31: #{tpu_custom_call.1} parent=15 // pred_region
          %p223 = scmp.lt.s32.totalorder %s23, 1
          %s224 = scalar_select %p223, %s23, 1
          %s225 = smul.addr %s224, 4
          %s226 = scalar_lea.vmem %s3, %s225
        $region32: #{tpu_custom_call.1} parent=15 // pred_fallthru
          _
      $region16: #{tpu_custom_call.1} parent=5 // pred_fallthru
        _
      %p227 = scmp.le.s32.totalorder 1, %s16
      %p228 = scmp.lt.s32.totalorder %s16, 3
      %p229 = pnand %p227, %p228
      %p230 = pneg %p229
      // Predicated region
      $region33: #{tpu_custom_call.1} parent=5 // pred_check
        _
      $region34: #{tpu_custom_call.1} parent=5 // pred_check_branch
        %232 = sbr.rel (%p229) target = $region36
      $region35: #{tpu_custom_call.1} parent=5 // pred_region
        %s233 = ssub.s32 %s16, 1
        %s234 = sand.u32 %s69, 1
        %s235 = scalar_lea.sflag [#allocation3], %s234
        %s236 = sand.u32 %s69, 1
        %s237 = scalar_lea.vmem [#allocation2], %s236
        // Predicated region
        $region37: #{tpu_custom_call.1} parent=35 // pred_check
          %p238 = pneg %p82
        $region38: #{tpu_custom_call.1} parent=35 // pred_check_branch
          %240 = sbr.rel (%p238) target = $region40
        $region39: #{tpu_custom_call.1} parent=35 // pred_region
          %241 = dma.done %s235, 16
        $region40: #{tpu_custom_call.1} parent=35 // pred_fallthru
          _
        %p242 = scmp.lt.s32.totalorder %s25, 1
        %s243 = scalar_select %p242, %s25, 1
        %p244 = scmp.lt.s32.totalorder %s26, 0
        %s245 = scalar_select %p244, %s26, 0
        %s246 = sadd.s32 %s245, %s243
        %s247 = smul.addr %s246, 8
        %s248 = scalar_lea.vmem %s0, %s247
        %p249 = pneg %p56
        %p250 = pneg %p53
        %s251 = sand.u32 %s69, 1
        %s252 = scalar_lea.sflag [#allocation3], %s251
        %s253 = sand.u32 %s69, 1
        %s254 = scalar_lea.vmem [#allocation2], %s253
        %p255 = pneg %p82
        %p256 = pneg %p79
        %p257 = scmp.lt.s32.totalorder %s25, 1
        %s258 = scalar_select %p257, %s25, 1
        %p259 = scmp.lt.s32.totalorder %s26, 0
        %s260 = scalar_select %p259, %s26, 0
        %s261 = sadd.s32 %s260, %s258
        %s262 = smul.addr %s261, 8
        %s263 = scalar_lea.vmem %s2, %s262
        %p264 = pneg %p110
        %p265 = pneg %p107
        %p266 = scmp.lt.s32.totalorder %s25, 1
        %s267 = scalar_select %p266, %s25, 1
        %s268 = smul.addr %s267, 4
        %s269 = scalar_lea.vmem %s3, %s268
        %p270 = pneg %p136
        %p271 = pneg %p133
        %p272 = pneg %p164
        %p273 = pneg %p161
        %s274 = sand.u32 %s151, 1
        %s275 = scalar_lea.sflag [#allocation4], %s274
        %s276 = sand.u32 %s151, 1
        %s277 = smul.addr %s276, 8
        %s278 = scalar_lea.vmem [#allocation5], %s277
        %p279 = scmp.lt.s32.totalorder %s25, 1
        %s280 = scalar_select %p279, %s25, 1
        %p281 = scmp.lt.s32.totalorder %s26, 0
        %s282 = scalar_select %p281, %s26, 0
        %s283 = sadd.s32 %s282, %s280
        %s284 = smul.addr %s283, 8
        %s285 = scalar_lea.vmem %s0, %s284
        %p286 = scmp.lt.s32.totalorder %s25, 1
        %s287 = scalar_select %p286, %s25, 1
        %p288 = scmp.lt.s32.totalorder %s26, 0
        %s289 = scalar_select %p288, %s26, 0
        %s290 = sadd.s32 %s289, %s287
        %s291 = smul.addr %s290, 8
        %s292 = scalar_lea.vmem %s2, %s291
        %p293 = scmp.lt.s32.totalorder %s25, 1
        %s294 = scalar_select %p293, %s25, 1
        %s295 = smul.addr %s294, 4
        %s296 = scalar_lea.vmem %s3, %s295
        %v298 = vld [vmem:[%s285] sm:$0xff]
        %v299 = vld [vmem:[%s237] sm:$0x1]
        %301 = vset.pattern.permute.xlu0 0
        %302 = vperm.xlu0 %301, %v298
        %v303 = vpop.permute.xlu0 %302
        %v306 = vlaneseq
        %v307 = vshrl.u32 %v306, 7
        %v308 = vsub.s32 0, %v307
        %v309 = vrot.slane %v299, %v308
        %v311 = vadd.f32 %v303, %v309
        %v312 = vld [vmem:[%s292] sm:$0xff]
        %v313 = vadd.f32 %v311, %v312
        %vm314 = vcmp.gt.f32.partialorder %v313, 0.0
        %v315 = vmul.f32 %v313, 0.2
        %v316 = vsel %vm314, %v313, %v315
        %vm317 = vcmask 64512
        %v318 = vsel %vm317, %v316, -inf
        %319 = vmax.xlane.f32.xlu0 %v318
        %v320 = vpop.xlane.xlu0 %319
        %v321 = vsub.f32 %v316, %v320
        %v322 = vmul.f32 %v321, 1.442695
        %v323 = vpow.pop %v322
        %v324 = vsel %vm317, %v323, 0.0
        %325 = vadd.xlane.f32.xlu0 %v324
        %v326 = vpop.xlane.xlu0 %325
        %v327 = vrcp.pop %v326
        %v328 = vmul.f32 1.0, %v327
        %v329 = vmul.f32 %v323, %v328
        %v330 = vpack.c.bf16 %v329, %v329
        %v331 = vld [vmem:[%s296] sm:$0xf]
        %v333 = vsel %vm317, %v330, 0
        %vm335 = vcmask 1043456
        %v337 = vsel %vm335, %v331, 0
        %339 = vmatprep.subr.bf16.mxu0 0
        %340 = vmatpush1.bf16.msra.mxu0 %v337
        %341 = vmatprep.subr.bf16.mxu0 0
        %342 = vmatpush1.bf16.msra.mxu0 0
        %343 = vmatprep.subr.bf16.mxu0 0
        %344 = vmatpush1.bf16.msra.mxu0 0
        %345 = vmatprep.subr.bf16.mxu0 0
        %346 = vmatpush1.bf16.msra.mxu0 0
        %347 = vmatprep.subr.bf16.mxu0 0
        %348 = vmatpush1.bf16.msra.mxu0 0
        %349 = vmatprep.subr.bf16.mxu0 0
        %350 = vmatpush1.bf16.msra.mxu0 0
        %351 = vmatprep.subr.bf16.mxu0 0
        %352 = vmatpush1.bf16.msra.mxu0 0
        %353 = vmatprep.subr.bf16.mxu0 0
        %354 = vmatpush1.bf16.msra.mxu0 0
        %355 = vmatprep.subr.bf16.mxu0 0
        %356 = vmatpush1.bf16.msra.mxu0 0
        %357 = vmatprep.subr.bf16.mxu0 0
        %358 = vmatpush1.bf16.msra.mxu0 0
        %359 = vmatprep.subr.bf16.mxu0 0
        %360 = vmatpush1.bf16.msra.mxu0 0
        %361 = vmatprep.subr.bf16.mxu0 0
        %362 = vmatpush1.bf16.msra.mxu0 0
        %363 = vmatprep.subr.bf16.mxu0 0
        %364 = vmatpush1.bf16.msra.mxu0 0
        %365 = vmatprep.subr.bf16.mxu0 0
        %366 = vmatpush1.bf16.msra.mxu0 0
        %367 = vmatprep.subr.bf16.mxu0 0
        %368 = vmatpush1.bf16.msra.mxu0 0
        %369 = vmatprep.subr.bf16.mxu0 0
        %370 = vmatpush1.bf16.msra.mxu0 0
        %371 = vmatprep.mubr.bf16.mxu0 0
        %372 = vmatmul.mubr.bf16.gmra.mrb[0].mxu0 %v333
        %v373 = vpop.f32.mrb[0].mxu0
        %v374 = vadd.f32 0.0, %v373
        %v375 = vpop.f32.mrb[0].mxu0
        %v376 = vpop.f32.mrb[0].mxu0
        %v377 = vpop.f32.mrb[0].mxu0
        %378 = vdwg.mxu0
        %vm379 = vcmp.gt.f32.partialorder %v374, 0.0
        %v380 = vmul.f32 %v374, 1.442695
        %v381 = vpow.pop %v380
        %v382 = vsub.f32 %v381, 1.0
        %v383 = vsel %vm379, %v374, %v382
        %384 = vst [vmem:[%s278] sm:$0xff] %v383
        %s385 = sand.u32 %s151, 1
        %s386 = scalar_lea.sflag [#allocation4], %s385
        %s387 = sand.u32 %s151, 1
        %s388 = smul.addr %s387, 8
        %s389 = scalar_lea.vmem [#allocation5], %s388
        // Predicated region
        $region41: #{tpu_custom_call.1} parent=35 // pred_check
          %p390 = pneg %p161
        $region42: #{tpu_custom_call.1} parent=35 // pred_check_branch
          %392 = sbr.rel (%p390) target = $region44
        $region43: #{tpu_custom_call.1} parent=35 // pred_region
          %s394 = ssub.s32 128, 128
          %395 = vsyncadd %s386, %s394
          %s396 = sadd.s32 %s26, %s25
          %s397 = smul.addr %s396, 128
          %s398 = scalar_lea.hbm %s4, %s397
          %s400 = sshll.u32 %s389, 4
          %s401 = int_to_ptr.vmem [resolvable:$true] %s400
          %403 = dma.vmem_to_hbm [thread:$0]  %s401, 128, %s398, %s386
        $region44: #{tpu_custom_call.1} parent=35 // pred_fallthru
          _
      $region36: #{tpu_custom_call.1} parent=5 // pred_fallthru
        _
      %p404 = scmp.le.s32.totalorder 2, %s16
      // Predicated region
      $region45: #{tpu_custom_call.1} parent=5 // pred_check
        %p405 = pneg %p404
      $region46: #{tpu_custom_call.1} parent=5 // pred_check_branch
        %407 = sbr.rel (%p405) target = $region48
      $region47: #{tpu_custom_call.1} parent=5 // pred_region
        %s408 = ssub.s32 %s16, 2
        // Predicated region
        $region49: #{tpu_custom_call.1} parent=47 // pred_check
          %p409 = pneg %p167
        $region50: #{tpu_custom_call.1} parent=47 // pred_check_branch
          %411 = sbr.rel (%p409) target = $region52
        $region51: #{tpu_custom_call.1} parent=47 // pred_region
          %s412 = sand.u32 %s152, 1
          %s413 = scalar_lea.sflag [#allocation4], %s412
          %s414 = sand.u32 %s152, 1
          %s415 = smul.addr %s414, 8
          %s416 = scalar_lea.vmem [#allocation5], %s415
          %417 = dma.done %s413, 128
        $region52: #{tpu_custom_call.1} parent=47 // pred_fallthru
          _
      $region48: #{tpu_custom_call.1} parent=5 // pred_fallthru
        _
    $region6: #{tpu_custom_call.1} parent=1 // loop_footer
      %s20 = sadd.s32 1, %s16
    $region7: #{tpu_custom_call.1} parent=1 // loop_footer_branch
      %15 = sbr.rel target = $region3
    $region8: #{tpu_custom_call.1} parent=1 // loop_exit
      _
    %418 = vsyncpa [#allocation3], 1
    %s419 = scalar_lea.sflag [#allocation3], 1
    %420 = vsyncpa %s419, 1
    %421 = vsyncpa [#allocation4], 1
    %s422 = scalar_lea.sflag [#allocation4], 1
    %423 = vsyncpa %s422, 1

</llo_original>
